<compile_context>
chip_gen: v7x
topology: tpu7x:2x2x1
jax: 0.10.0
libtpu: 0.0.40
codegen_flags: <defaults>
</compile_context>

<pallas_src>
import jax
import jax.numpy as jnp
from jax.experimental import pallas as pl
from jax.experimental.pallas import tpu as pltpu


# ----------------------------------------------------------------------------
# Parameter construction (mirrors SpatialAttentionWeight.initialize_weights)
# ----------------------------------------------------------------------------
def make_spatial_weights(height, width, N, center_weight, dtype=jnp.float32):
    """ones(H, W) with a centered block set to center_weight.

    Same slicing as the PyTorch module: rows/cols [c - N//2 : c + N//2], so an
    odd N yields a (N-1)x(N-1) block — identical to the reference."""
    w = jnp.ones((height, width), dtype=dtype)
    ch, cw = height // 2, width // 2
    r0, r1 = ch - N // 2, ch + N // 2
    c0, c1 = cw - N // 2, cw + N // 2
    w = w.at[r0:r1, c0:c1].set(jnp.asarray(center_weight, dtype=dtype))
    return w


# ----------------------------------------------------------------------------
# Pallas kernel: out[r, :] = x[r, :] * w[0, :]   (row-broadcast multiply)
# ----------------------------------------------------------------------------
def _spatial_attn_mul_kernel(x_ref, w_ref, o_ref):
    # x_ref/o_ref: (rows_per_block, cols_per_block); w_ref: (1, cols_per_block)
    o_ref[...] = x_ref[...] * w_ref[...]


# ----------------------------------------------------------------------------
# Tile sizing helpers
# ----------------------------------------------------------------------------
_LANE = 128
_TINY_BYTES = 1 << 20           # below this, plain x*w (XLA-fused) is cheaper


def _sublane_granule(itemsize):
    # Sub-32-bit dtypes pack along sublanes: 8 rows f32, 16 bf16, 32 int8/fp8.
    return 8 * max(1, 4 // int(itemsize))


def _tpu_generation():
    try:
        kind = jax.devices()[0].device_kind.lower()
    except Exception:
        return None
    if "v7" in kind:
        return 7
    if "v6" in kind:
        return 6
    if "v5" in kind:
        return 5
    return None


def _tile_budget():
    """(target_tile_bytes, vmem_limit_bytes) per chip generation."""
    gen = _tpu_generation()
    if gen is not None and gen >= 7:
        # 2 arrays x 2 buffers x 8 MiB = 32 MiB << 64 MiB physical VMEM.
        return 8 << 20, 48 << 20
    if gen == 6:
        return 4 << 20, 32 << 20
    # v5e / unknown: conservative, under the 16 MiB scoped default anyway.
    return 2 << 20, 24 << 20


def _choose_blocks(R, L, itemsize, target_bytes):
    gran = _sublane_granule(itemsize)

    # --- lane (last) dim -----------------------------------------------------
    # Prefer the full flattened width (always a legal full-dim block).  Only
    # tile it when even a one-granule-row slab of full width would blow the
    # per-tile budget; then use a multiple-of-128 block and let pl.cdiv handle
    # a (masked) partial last column block — no divisibility requirement.
    if L <= _LANE or L * itemsize * gran <= target_bytes:
        cols = L
    else:
        cols = (target_bytes // (gran * itemsize)) // _LANE * _LANE
        cols = max(_LANE, min(cols, max(_LANE, (L // _LANE) * _LANE)))

    # --- sublane (second-to-last) dim ---------------------------------------
    bytes_per_row = max(cols * itemsize, 1)
    rows = (target_bytes // bytes_per_row) // gran * gran
    rows = max(gran, rows)
    if rows >= R:
        rows = R                       # full dim is always legal

    # --- guarantee >=2 blocks for large tensors (v7x has 2 TensorCores) ------
    total_bytes = R * L * itemsize
    if rows >= R and cols >= L and total_bytes >= (2 << 20) and R >= 2 * gran:
        rows = max(gran, (R // 2) // gran * gran)

    return rows, cols


# ----------------------------------------------------------------------------
# Forward: apply the spatial attention weight map to x
# ----------------------------------------------------------------------------
def spatial_attention_weight_apply(x, weights_hw, *, force_pallas=False):
    """x: (B, C, H, W); weights_hw: (Hb, Wb) base weight map (resized here if
    its shape differs from x's spatial dims)."""
    B, C, H, W = x.shape
    if weights_hw.shape != (H, W):
        # Glue outside the kernel: bilinear, half-pixel centers, no antialias
        # — matches F.interpolate(mode='bilinear', align_corners=False).
        weights_hw = jax.image.resize(
            weights_hw, (H, W), method="bilinear", antialias=False)
    weights_hw = weights_hw.astype(x.dtype)

    itemsize = jnp.dtype(x.dtype).itemsize
    total_bytes = B * C * H * W * itemsize

    # Tiny inputs: pallas_call launch/prologue dominates; let XLA fuse it.
    if total_bytes < _TINY_BYTES and not force_pallas:
        return x * weights_hw[None, None, :, :]

    # ---- lane-dense 2-D view -------------------------------------------------
    L = H * W
    if L % _LANE != 0 and C > 1:
        # Fold channels into the lane axis; the weight map is tiny so tiling
        # it C times is free, and the output stays lane-dense.
        R, Lf = B, C * L
        x2 = x.reshape(R, Lf)                                    # free reshape
        w2 = jnp.tile(weights_hw.reshape(-1), (C,)).reshape(1, Lf)
    else:
        R, Lf = B * C, L
        x2 = x.reshape(R, Lf)                                    # free reshape
        w2 = weights_hw.reshape(1, Lf)

    target_bytes, vmem_limit = _tile_budget()
    rows_per_block, cols_per_block = _choose_blocks(R, Lf, itemsize, target_bytes)

    n_row_blocks = pl.cdiv(R, rows_per_block)
    n_col_blocks = pl.cdiv(Lf, cols_per_block)
    # Column axis OUTER so the weight block index (0, j) is constant across
    # the inner row sweep (weight stays resident, no re-DMA per row tile).
    grid = (n_col_blocks, n_row_blocks)

    out2 = pl.pallas_call(
        _spatial_attn_mul_kernel,
        out_shape=jax.ShapeDtypeStruct((R, Lf), x.dtype),
        grid=grid,
        in_specs=[
            pl.BlockSpec((rows_per_block, cols_per_block), lambda j, i: (i, j)),
            pl.BlockSpec((1, cols_per_block), lambda j, i: (0, j)),
        ],
        out_specs=pl.BlockSpec((rows_per_block, cols_per_block),
                               lambda j, i: (i, j)),
        compiler_params=pltpu.CompilerParams(
            dimension_semantics=("parallel", "parallel"),
            vmem_limit_bytes=vmem_limit),
    )(x2, w2)
    return out2.reshape(B, C, H, W)


# ----------------------------------------------------------------------------
# Module-like wrapper
# ----------------------------------------------------------------------------
class SpatialAttentionWeightPallas:
    def __init__(self, height, width, N, center_weight):
        self.base_height = height
        self.base_width = width
        self.N = N
        self.center_weight = center_weight
        self.weights = make_spatial_weights(height, width, N, center_weight)
        self._resize_cache = {(height, width): self.weights}

    def _weights_for(self, H, W):
        key = (H, W)
        if key not in self._resize_cache:
            self._resize_cache[key] = jax.image.resize(
                self.weights, (H, W), method="bilinear", antialias=False)
        return self._resize_cache[key]

    def __call__(self, x, *, force_pallas=False):
        w = self._weights_for(x.shape[2], x.shape[3])
        return spatial_attention_weight_apply(x, w, force_pallas=force_pallas)


if __name__ == "__main__":
    # Small deterministic example consistent with the module's forward:
    # batch=2, channels=4, spatial 16x16, center region N=8, center_weight=2.0
    B, C, H, W = 2, 4, 16, 16
    N, center_weight = 8, 2.0

    key = jax.random.PRNGKey(0)
    x = jax.random.normal(key, (B, C, H, W), dtype=jnp.float32)

    mod = SpatialAttentionWeightPallas(H, W, N, center_weight)
    # force_pallas=True: the demo input is KiB-scale, so the default path
    # would (correctly) skip the kernel; we force it to exercise pallas_call.
    out = jax.block_until_ready(mod(x, force_pallas=True))

    # Pure-JAX reference check of the multiply semantics (no-resize path).
    ref = x * mod.weights[None, None, :, :]
    assert out.shape == (B, C, H, W)
    assert jnp.allclose(out, ref, atol=1e-6, rtol=1e-6)

    print("KERNEL_OK")
</pallas_src>

<mosaic_0001>
module attributes {stable_mosaic.version = 11 : i64} {
  func.func @_spatial_attn_mul_kernel(%arg0: i32, %arg1: i32, %arg2: memref<8x256xf32, #tpu.memory_space<vmem>>, %arg3: memref<1x256xf32, #tpu.memory_space<vmem>>, %arg4: memref<8x256xf32, #tpu.memory_space<vmem>>) attributes {dimension_semantics = [#tpu.dimension_semantics<parallel>, #tpu.dimension_semantics<parallel>], iteration_bounds = array<i64: 1, 1>, scalar_prefetch = 0 : i64, scratch_operands = 0 : i64, tpu.core_type = #tpu.core_type<tc>, window_params = [{transform_indices = @transform_0, window_bounds = array<i64: 8, 256>}, {transform_indices = @transform_1, window_bounds = array<i64: 1, 256>}, {transform_indices = @transform_2, window_bounds = array<i64: 8, 256>}]} {
    %c0 = arith.constant 0 : index
    %c0_0 = arith.constant 0 : index
    %0 = vector.load %arg2[%c0, %c0_0] : memref<8x256xf32, #tpu.memory_space<vmem>>, vector<8x256xf32>
    %c0_1 = arith.constant 0 : index
    %c0_2 = arith.constant 0 : index
    %1 = vector.load %arg3[%c0_1, %c0_2] : memref<1x256xf32, #tpu.memory_space<vmem>>, vector<1x256xf32>
    %2 = vector.broadcast %1 : vector<1x256xf32> to vector<8x256xf32>
    %3 = arith.mulf %0, %2 : vector<8x256xf32>
    %c0_3 = arith.constant 0 : index
    %c0_4 = arith.constant 0 : index
    %4 = vector.load %arg4[%c0_3, %c0_4] : memref<8x256xf32, #tpu.memory_space<vmem>>, vector<8x256xf32>
    tpu.vector_store %arg4[%c0_3, %c0_4], %3 {strides = array<i32>} : memref<8x256xf32, #tpu.memory_space<vmem>>, vector<8x256xf32>,
    return
  }
  func.func @transform_0(%arg0: i32, %arg1: i32) -> (i32, i32) {
    %c0_i32 = arith.constant 0 : i32
    return %arg1, %arg0 : i32, i32
  }
  func.func @transform_1(%arg0: i32, %arg1: i32) -> (i32, i32) {
    %c0_i32 = arith.constant 0 : i32
    %c0_i32_0 = arith.constant 0 : i32
    return %c0_i32, %arg0 : i32, i32
  }
  func.func @transform_2(%arg0: i32, %arg1: i32) -> (i32, i32) {
    %c0_i32 = arith.constant 0 : i32
    return %arg1, %arg0 : i32, i32
  }
}

</mosaic_0001>

<llo_original>
// kernel: tpu_custom_call.1
$region0: #{tpu_custom_call.1}
  #allocation0 [shape = 'u32[]', space=smem, size = 0x4, offset = 0x4, fixed_abs, tag = 'smem constant byte address 0x4 - core index']
  #allocation1 [shape = 'u32[144,128]{1,0:T(1,128)}', space=vmem, size = 0x12000, scoped, tag = 'internal scratch']
  %s0 = inlined_call_operand.hbm [shape: f32[8,256], index: 0, kind: input, shape index: {}]
  %s1 = inlined_call_operand.vmem [shape: f32[1,256], index: 1, kind: input, shape index: {}]
  %s2 = inlined_call_operand.hbm [shape: f32[8,256], index: 2, kind: output, shape index: {}]
  %s3 = sld [smem:[#allocation0]]
  $region22: #{tpu_custom_call.1} parent=0
    _
  %s5 = ssub.s32 1, %s3
  %s6 = scalar_select 0, %s5, %s3
  $region1: #{tpu_custom_call.1} parent=0
    #allocation2 [shape = 'u8[8192]{0}', space=vmem, size = 0x2000, scoped, tag = 'input window, operand 0, single buffered']
    #allocation3 [shape = 's32[1]{0}', space=sflag, size = 0x4, scoped, tag = 'scoped memory for tpu_custom_call.1']
    #allocation4 [shape = 's32[1]{0}', space=sflag, size = 0x4, scoped, tag = 'scoped memory for tpu_custom_call.1']
    #allocation5 [shape = 'u8[8192]{0}', space=vmem, size = 0x2000, scoped, tag = 'output window, operand 0, single buffered']
    %7 = vsyncpa [#allocation3], 0
    %8 = vsyncpa [#allocation4], 0
    // Predicated region
    $region2: #{tpu_custom_call.1} parent=1 // pred_check
      _
    $region3: #{tpu_custom_call.1} parent=1 // pred_check_branch
      %10 = sbr.rel (0) target = $region5
    $region4: #{tpu_custom_call.1} parent=1 // pred_region
      %s12 = ssub.s32 256, 256
      %13 = vsyncadd [#allocation3], %s12
      %s15 = sshll.u32 [#allocation2], 4
      %s16 = int_to_ptr.vmem [resolvable:$true] %s15
      %18 = dma.hbm_to_vmem [thread:$0]  %s0, 256, %s16, [#allocation3]
    $region5: #{tpu_custom_call.1} parent=1 // pred_fallthru
      _
    // Predicated region
    $region6: #{tpu_custom_call.1} parent=1 // pred_check
      _
    $region7: #{tpu_custom_call.1} parent=1 // pred_check_branch
      %20 = sbr.rel (0) target = $region9
    $region8: #{tpu_custom_call.1} parent=1 // pred_region
      _
    $region9: #{tpu_custom_call.1} parent=1 // pred_fallthru
      _
    // Predicated region
    $region10: #{tpu_custom_call.1} parent=1 // pred_check
      _
    $region11: #{tpu_custom_call.1} parent=1 // pred_check_branch
      %22 = sbr.rel (0) target = $region13
    $region12: #{tpu_custom_call.1} parent=1 // pred_region
      %23 = dma.done [#allocation3], 256
    $region13: #{tpu_custom_call.1} parent=1 // pred_fallthru
      _
    %v24 = vld [vmem:[#allocation2] sm:$0xff]
    %v25 = vld [vmem:[#allocation2 + $0x8] sm:$0xff]
    %v26 = vld [vmem:[%s1] sm:$0x3]
    %v28 = vlaneseq
    %v29 = vshrl.u32 %v28, 7
    %v30 = vsub.s32 0, %v29
    %v31 = vrot.slane %v26, %v30
    %v32 = vlaneseq
    %v33 = vshrl.u32 %v32, 7
    %v34 = vsub.s32 1, %v33
    %v35 = vrot.slane %v26, %v34
    %v38 = vmul.f32 %v24, %v31
    %v39 = vmul.f32 %v25, %v35
    %40 = vst [vmem:[#allocation5] sm:$0xff] %v38
    %41 = vst [vmem:[#allocation5 + $0x8] sm:$0xff] %v39
    // Predicated region
    $region14: #{tpu_custom_call.1} parent=1 // pred_check
      _
    $region15: #{tpu_custom_call.1} parent=1 // pred_check_branch
      %43 = sbr.rel (0) target = $region17
    $region16: #{tpu_custom_call.1} parent=1 // pred_region
      %s45 = ssub.s32 256, 256
      %46 = vsyncadd [#allocation4], %s45
      %s48 = sshll.u32 [#allocation5], 4
      %s49 = int_to_ptr.vmem [resolvable:$true] %s48
      %51 = dma.vmem_to_hbm [thread:$0]  %s49, 256, %s2, [#allocation4]
    $region17: #{tpu_custom_call.1} parent=1 // pred_fallthru
      _
    // Predicated region
    $region18: #{tpu_custom_call.1} parent=1 // pred_check
      _
    $region19: #{tpu_custom_call.1} parent=1 // pred_check_branch
      %53 = sbr.rel (0) target = $region21
    $region20: #{tpu_custom_call.1} parent=1 // pred_region
      %54 = dma.done [#allocation4], 256
    $region21: #{tpu_custom_call.1} parent=1 // pred_fallthru
      _
    %55 = vsyncpa [#allocation3], 1
    %56 = vsyncpa [#allocation4], 1

</llo_original>
